<compile_context>
chip_gen: v7x
topology: tpu7x:2x2x1
jax: 0.10.0
libtpu: 0.0.40
codegen_flags: <defaults>
</compile_context>

<pallas_src>
import functools
import math

import jax
import jax.numpy as jnp
from jax.experimental import pallas as pl
from jax.experimental.pallas import tpu as pltpu

_LANE = 128
_SUBLANE = 8
_H1 = 256  # fc1 width (fixed by the module)


def _round_up(x, m):
    return ((x + m - 1) // m) * m


def _cdiv(a, b):
    return -(-a // b)


def _critic_kernel(x_ref, w1_ref, b1_ref, w2_ref, b2_ref, w3_ref, b3_ref, o_ref,
                   *, lane_dense):
    # fc1 + ReLU (MXU, bf16 operands, f32 accumulate)
    h1 = jnp.dot(x_ref[...], w1_ref[...], preferred_element_type=jnp.float32)
    h1 = jnp.maximum(h1 + b1_ref[...], 0.0).astype(jnp.bfloat16)
    # fc2 + ReLU (hidden width zero-padded to 128 -> full-vreg lanes)
    h2 = jnp.dot(h1, w2_ref[...], preferred_element_type=jnp.float32)
    h2 = jnp.maximum(h2 + b2_ref[...], 0.0).astype(jnp.bfloat16)
    if lane_dense:
        # output_size == 1: produce a lane-dense (1, TB) row instead of a
        # 1-lane-wide (TB, 1) column.  w3_ref is (8, 128) with the real weight
        # row in sublane 0 and zeros elsewhere; contract the 128-dim of both
        # operands (transposed-B matmul, same dimension numbers as the flash
        # attention kernel), then keep sublane 0.
        rows = jax.lax.dot_general(
            w3_ref[...], h2,
            dimension_numbers=(((1,), (1,)), ((), ())),
            preferred_element_type=jnp.float32)            # (8, TB)
        o_ref[...] = (rows[0:1, :] + b3_ref[...]).astype(o_ref.dtype)
    else:
        out = jnp.dot(h2, w3_ref[...], preferred_element_type=jnp.float32)
        o_ref[...] = (out + b3_ref[...]).astype(o_ref.dtype)


def _vmem_bytes_estimate(tb, in_size, h2p, out_size):
    """Rough VMEM footprint: double-buffered x/out tiles + (double-buffered)
    resident weights + live intermediates.  Used to clamp the batch tile."""
    bf16, f32 = 2, 4
    x_io = 2 * tb * in_size * bf16
    out_io = 2 * tb * max(out_size, 1) * f32
    w_bytes = ((in_size * _H1 + _H1 * h2p + h2p * max(out_size, _SUBLANE)) * bf16
               + (_H1 + h2p + max(out_size, 1)) * f32)
    live = tb * _H1 * (f32 + bf16) + tb * h2p * (f32 + bf16)
    return x_io + out_io + 2 * w_bytes + live


def a2c_critic_forward(x, params, *, block_b=2048):
    """x: [B, input_size] float32 -> [B, output_size] float32."""
    w1, b1, w2, b2, w3, b3 = params
    B, in_size = x.shape
    h2 = w2.shape[1]
    out_size = w3.shape[1]
    h2p = _round_up(h2, _LANE)             # 64 -> 128: full-vreg hidden layer
    lane_dense = out_size == 1

    # ---- parameter prep ---------------------------------------------------
    w2p = jnp.pad(w2, ((0, 0), (0, h2p - h2)))
    b2p = jnp.pad(b2, ((0, 0), (0, h2p - h2)))
    w3p = jnp.pad(w3, ((0, h2p - h2), (0, 0)))                 # (h2p, out)
    if lane_dense:
        # (1, h2p) row padded to 8 sublanes so the MXU operand is well formed.
        w3_arg = jnp.pad(w3p.T, ((0, _SUBLANE - 1), (0, 0)))   # (8, h2p)
    else:
        w3_arg = w3p                                           # (h2p, out)

    # bf16 matmul operands, f32 biases / accumulation.
    xb = x.astype(jnp.bfloat16)
    w1b, w2b, w3b = (a.astype(jnp.bfloat16) for a in (w1, w2p, w3_arg))
    b1f, b2f, b3f = (a.astype(jnp.float32) for a in (b1, b2p, b3))

    # ---- batch tile selection ----------------------------------------------
    vmem_budget = 20 << 20                 # fits v7x's 32 MiB default scoped VMEM
    tb_cap = max(_SUBLANE, _round_up(min(block_b, B), _SUBLANE))
    while tb_cap > _SUBLANE and _vmem_bytes_estimate(tb_cap, in_size, h2p, out_size) > vmem_budget:
        tb_cap = max(_SUBLANE, _round_up(tb_cap // 2, _SUBLANE))

    num_tiles = _cdiv(B, tb_cap)
    # v7x has 2 TensorCores: with enough rows keep an even grid (>= 2) so the
    # "parallel" batch axis actually uses both cores.
    if B >= 2048 and num_tiles % 2 == 1:
        num_tiles += 1
    if num_tiles == 1:
        TB = _round_up(B, _SUBLANE)
    else:
        # Lane-dense output block's last dim must be a multiple of 128 when it
        # is not the full array extent; balanced tiles also minimize padding.
        TB = _round_up(_cdiv(B, num_tiles), _LANE)
    B_pad = TB * num_tiles
    if B_pad != B:
        xb = jnp.pad(xb, ((0, B_pad - B), (0, 0)))

    # Weights & biases: constant index_map -> loaded once, VMEM-resident.
    resident = lambda arr: pl.BlockSpec(arr.shape, lambda i: (0,) * arr.ndim)

    if lane_dense:
        out_shape = jax.ShapeDtypeStruct((1, B_pad), jnp.float32)
        out_spec = pl.BlockSpec((1, TB), lambda i: (0, i))
    else:
        out_shape = jax.ShapeDtypeStruct((B_pad, out_size), jnp.float32)
        out_spec = pl.BlockSpec((TB, out_size), lambda i: (i, 0))

    est = _vmem_bytes_estimate(TB, in_size, h2p, out_size)
    vmem_limit = int(min(48 << 20, max(32 << 20, 2 * est)))

    out = pl.pallas_call(
        functools.partial(_critic_kernel, lane_dense=lane_dense),
        out_shape=out_shape,
        grid=(num_tiles,),
        in_specs=[
            pl.BlockSpec((TB, in_size), lambda i: (i, 0)),   # x: tiled over batch
            resident(w1b), resident(b1f),
            resident(w2b), resident(b2f),
            resident(w3b), resident(b3f),
        ],
        out_specs=out_spec,
        compiler_params=pltpu.CompilerParams(
            dimension_semantics=("parallel",),
            vmem_limit_bytes=vmem_limit,
        ),
    )(xb, w1b, b1f, w2b, b2f, w3b, b3f)

    if lane_dense:
        return out.reshape(B_pad, 1)[:B]
    return out[:B]


def init_params(key, input_size, output_size):
    """Deterministic init mirroring the PyTorch module's __init__ semantics:
    fc1/fc2 weights: kaiming_uniform_(nonlinearity='relu') -> U(-sqrt(6/fan_in), +)
    fc3 weight:      PyTorch Linear default -> U(-1/sqrt(fan_in), +)
    biases:          PyTorch Linear default -> U(-1/sqrt(fan_in), +)
    Weights are returned as [in, out] (transposed vs. PyTorch)."""
    k = jax.random.split(key, 6)

    def uni(subkey, shape, bound):
        return jax.random.uniform(subkey, shape, jnp.float32, -bound, bound)

    w1 = uni(k[0], (input_size, 256), math.sqrt(6.0 / input_size))
    b1 = uni(k[1], (1, 256), 1.0 / math.sqrt(input_size))
    w2 = uni(k[2], (256, 64), math.sqrt(6.0 / 256))
    b2 = uni(k[3], (1, 64), 1.0 / math.sqrt(256))
    w3 = uni(k[4], (64, output_size), 1.0 / math.sqrt(64))
    b3 = uni(k[5], (1, output_size), 1.0 / math.sqrt(64))
    return (w1, b1, w2, b2, w3, b3)


def reference_forward(x, params):
    w1, b1, w2, b2, w3, b3 = params
    h1 = jnp.maximum(x @ w1 + b1, 0.0)
    h2 = jnp.maximum(h1 @ w2 + b2, 0.0)
    return h2 @ w3 + b3


if __name__ == "__main__":
    input_size = 32
    output_size = 1   # critic -> scalar value per state

    key = jax.random.PRNGKey(0)
    kx1, kx2, kp = jax.random.split(key, 3)
    params = init_params(kp, input_size, output_size)

    # bf16 matmul operands vs. f32 reference -> relaxed tolerances.
    tol = dict(atol=5e-2, rtol=5e-2)

    # Case 1: tiny batch, single tile.
    x1 = jax.random.normal(kx1, (8, input_size), dtype=jnp.float32)
    out1 = jax.block_until_ready(a2c_critic_forward(x1, params))
    ref1 = reference_forward(x1, params)
    assert out1.shape == (8, output_size)
    assert jnp.allclose(out1, ref1, **tol), "mismatch vs reference (B=8)"

    # Case 2: batch not a multiple of 8 (exercises minimal padding, one tile).
    x2 = jax.random.normal(kx2, (300, input_size), dtype=jnp.float32)
    out2 = jax.block_until_ready(a2c_critic_forward(x2, params))
    ref2 = reference_forward(x2, params)
    assert out2.shape == (300, output_size)
    assert jnp.allclose(out2, ref2, **tol), "mismatch vs reference (B=300)"

    # Case 3: force a multi-tile grid (exercises the pipelined, lane-dense
    # multi-block store path) while keeping shapes small.
    out3 = jax.block_until_ready(a2c_critic_forward(x2, params, block_b=128))
    assert out3.shape == (300, output_size)
    assert jnp.allclose(out3, ref2, **tol), "mismatch vs reference (B=300, multi-tile)"

    print("KERNEL_OK")
</pallas_src>

<mosaic_0001>
module attributes {stable_mosaic.version = 11 : i64} {
  func.func @_critic_kernel(%arg0: i32, %arg1: memref<8x32xbf16, #tpu.memory_space<vmem>>, %arg2: memref<32x256xbf16, #tpu.memory_space<vmem>>, %arg3: memref<1x256xf32, #tpu.memory_space<vmem>>, %arg4: memref<256x128xbf16, #tpu.memory_space<vmem>>, %arg5: memref<1x128xf32, #tpu.memory_space<vmem>>, %arg6: memref<8x128xbf16, #tpu.memory_space<vmem>>, %arg7: memref<1x1xf32, #tpu.memory_space<vmem>>, %arg8: memref<1x8xf32, #tpu.memory_space<vmem>>) attributes {dimension_semantics = [#tpu.dimension_semantics<parallel>], iteration_bounds = array<i64: 1>, scalar_prefetch = 0 : i64, scratch_operands = 0 : i64, tpu.core_type = #tpu.core_type<tc>, window_params = [{transform_indices = @transform_0, window_bounds = array<i64: 8, 32>}, {pipeline_mode = #tpu.pipeline_mode<synchronous>, transform_indices = @transform_1, window_bounds = array<i64: 32, 256>}, {pipeline_mode = #tpu.pipeline_mode<synchronous>, transform_indices = @transform_2, window_bounds = array<i64: 1, 256>}, {pipeline_mode = #tpu.pipeline_mode<synchronous>, transform_indices = @transform_3, window_bounds = array<i64: 256, 128>}, {pipeline_mode = #tpu.pipeline_mode<synchronous>, transform_indices = @transform_4, window_bounds = array<i64: 1, 128>}, {pipeline_mode = #tpu.pipeline_mode<synchronous>, transform_indices = @transform_5, window_bounds = array<i64: 8, 128>}, {pipeline_mode = #tpu.pipeline_mode<synchronous>, transform_indices = @transform_6, window_bounds = array<i64: 1, 1>}, {transform_indices = @transform_7, window_bounds = array<i64: 1, 8>}]} {
    %c0 = arith.constant 0 : index
    %c0_0 = arith.constant 0 : index
    %0 = vector.load %arg1[%c0, %c0_0] : memref<8x32xbf16, #tpu.memory_space<vmem>>, vector<8x32xbf16>
    %c0_1 = arith.constant 0 : index
    %c0_2 = arith.constant 0 : index
    %1 = vector.load %arg2[%c0_1, %c0_2] : memref<32x256xbf16, #tpu.memory_space<vmem>>, vector<32x256xbf16>
    %cst = arith.constant dense<0.000000e+00> : vector<8x256xf32>
    %2 = tpu.matmul %0, %1, %cst {dimension_numbers = #tpu.dot_dimension_numbers<[1], [0], [0], [1], [0, 0, 1, 1], [], []>} : vector<8x32xbf16>, vector<32x256xbf16>, vector<8x256xf32> -> vector<8x256xf32>
    %c0_3 = arith.constant 0 : index
    %c0_4 = arith.constant 0 : index
    %3 = vector.load %arg3[%c0_3, %c0_4] : memref<1x256xf32, #tpu.memory_space<vmem>>, vector<1x256xf32>
    %4 = vector.broadcast %3 : vector<1x256xf32> to vector<8x256xf32>
    %5 = arith.addf %2, %4 : vector<8x256xf32>
    %cst_5 = arith.constant 0.000000e+00 : f32
    %6 = vector.broadcast %cst_5 : f32 to vector<8x256xf32>
    %7 = arith.maximumf %5, %6 : vector<8x256xf32>
    %8 = arith.truncf %7 : vector<8x256xf32> to vector<8x256xbf16>
    %c0_6 = arith.constant 0 : index
    %c0_7 = arith.constant 0 : index
    %9 = vector.load %arg4[%c0_6, %c0_7] : memref<256x128xbf16, #tpu.memory_space<vmem>>, vector<256x128xbf16>
    %cst_8 = arith.constant dense<0.000000e+00> : vector<8x128xf32>
    %10 = tpu.matmul %8, %9, %cst_8 {dimension_numbers = #tpu.dot_dimension_numbers<[1], [0], [0], [1], [0, 0, 1, 1], [], []>} : vector<8x256xbf16>, vector<256x128xbf16>, vector<8x128xf32> -> vector<8x128xf32>
    %c0_9 = arith.constant 0 : index
    %c0_10 = arith.constant 0 : index
    %11 = vector.load %arg5[%c0_9, %c0_10] : memref<1x128xf32, #tpu.memory_space<vmem>>, vector<1x128xf32>
    %12 = vector.broadcast %11 : vector<1x128xf32> to vector<8x128xf32>
    %13 = arith.addf %10, %12 : vector<8x128xf32>
    %cst_11 = arith.constant 0.000000e+00 : f32
    %14 = vector.broadcast %cst_11 : f32 to vector<8x128xf32>
    %15 = arith.maximumf %13, %14 : vector<8x128xf32>
    %16 = arith.truncf %15 : vector<8x128xf32> to vector<8x128xbf16>
    %c0_12 = arith.constant 0 : index
    %c0_13 = arith.constant 0 : index
    %17 = vector.load %arg6[%c0_12, %c0_13] : memref<8x128xbf16, #tpu.memory_space<vmem>>, vector<8x128xbf16>
    %cst_14 = arith.constant dense<0.000000e+00> : vector<8x8xf32>
    %18 = tpu.matmul %17, %16, %cst_14 {dimension_numbers = #tpu.dot_dimension_numbers<[1], [1], [0], [0], [0, 0, 1, 0], [], []>} : vector<8x128xbf16>, vector<8x128xbf16>, vector<8x8xf32> -> vector<8x8xf32>
    %19 = vector.extract_strided_slice %18 {offsets = [0, 0], sizes = [1, 8], strides = [1, 1]} : vector<8x8xf32> to vector<1x8xf32>
    %c0_15 = arith.constant 0 : index
    %c0_16 = arith.constant 0 : index
    %20 = vector.load %arg7[%c0_15, %c0_16] : memref<1x1xf32, #tpu.memory_space<vmem>>, vector<1x1xf32>
    %21 = vector.broadcast %20 : vector<1x1xf32> to vector<1x8xf32>
    %22 = arith.addf %19, %21 : vector<1x8xf32>
    %c0_17 = arith.constant 0 : index
    %c0_18 = arith.constant 0 : index
    %23 = vector.load %arg8[%c0_17, %c0_18] : memref<1x8xf32, #tpu.memory_space<vmem>>, vector<1x8xf32>
    tpu.vector_store %arg8[%c0_17, %c0_18], %22 {strides = array<i32>} : memref<1x8xf32, #tpu.memory_space<vmem>>, vector<1x8xf32>,
    return
  }
  func.func @transform_0(%arg0: i32) -> (i32, i32) {
    %c0_i32 = arith.constant 0 : i32
    %c0_i32_0 = arith.constant 0 : i32
    return %arg0, %c0_i32 : i32, i32
  }
  func.func @transform_1(%arg0: i32) -> (i32, i32) {
    %c0_i32 = arith.constant 0 : i32
    %c0_i32_0 = arith.constant 0 : i32
    %c0_i32_1 = arith.constant 0 : i32
    return %c0_i32, %c0_i32_0 : i32, i32
  }
  func.func @transform_2(%arg0: i32) -> (i32, i32) {
    %c0_i32 = arith.constant 0 : i32
    %c0_i32_0 = arith.constant 0 : i32
    %c0_i32_1 = arith.constant 0 : i32
    return %c0_i32, %c0_i32_0 : i32, i32
  }
  func.func @transform_3(%arg0: i32) -> (i32, i32) {
    %c0_i32 = arith.constant 0 : i32
    %c0_i32_0 = arith.constant 0 : i32
    %c0_i32_1 = arith.constant 0 : i32
    return %c0_i32, %c0_i32_0 : i32, i32
  }
  func.func @transform_4(%arg0: i32) -> (i32, i32) {
    %c0_i32 = arith.constant 0 : i32
    %c0_i32_0 = arith.constant 0 : i32
    %c0_i32_1 = arith.constant 0 : i32
    return %c0_i32, %c0_i32_0 : i32, i32
  }
  func.func @transform_5(%arg0: i32) -> (i32, i32) {
    %c0_i32 = arith.constant 0 : i32
    %c0_i32_0 = arith.constant 0 : i32
    %c0_i32_1 = arith.constant 0 : i32
    return %c0_i32, %c0_i32_0 : i32, i32
  }
  func.func @transform_6(%arg0: i32) -> (i32, i32) {
    %c0_i32 = arith.constant 0 : i32
    %c0_i32_0 = arith.constant 0 : i32
    %c0_i32_1 = arith.constant 0 : i32
    return %c0_i32, %c0_i32_0 : i32, i32
  }
  func.func @transform_7(%arg0: i32) -> (i32, i32) {
    %c0_i32 = arith.constant 0 : i32
    %c0_i32_0 = arith.constant 0 : i32
    return %c0_i32, %arg0 : i32, i32
  }
}

</mosaic_0001>

<llo_original>
// kernel: tpu_custom_call.1
$region0: #{tpu_custom_call.1}
  #allocation0 [shape = 'u32[]', space=smem, size = 0x4, offset = 0x4, fixed_abs, tag = 'smem constant byte address 0x4 - core index']
  #allocation1 [shape = 'u32[144,128]{1,0:T(1,128)}', space=vmem, size = 0x12000, scoped, tag = 'internal scratch']
  #allocation2 [shape = 'f32[1,1]{1,0:T(1,128)S(1)}', space=vmem, size = 0x200, scoped, tag = 'scoped memory for tpu_custom_call.1']
  %s0 = inlined_call_operand.hbm [shape: bf16[8,32], index: 0, kind: input, shape index: {}]
  %s1 = inlined_call_operand.hbm [shape: bf16[32,256], index: 1, kind: input, shape index: {}]
  %s2 = inlined_call_operand.vmem [shape: f32[1,256], index: 2, kind: input, shape index: {}]
  %s3 = inlined_call_operand.hbm [shape: bf16[256,128], index: 3, kind: input, shape index: {}]
  %s4 = inlined_call_operand.vmem [shape: f32[1,128], index: 4, kind: input, shape index: {}]
  %s5 = inlined_call_operand.vmem [shape: bf16[8,128], index: 5, kind: input, shape index: {}]
  %s6 = inlined_call_operand.<no memory space> [shape: f32[1,1], index: 6, kind: input, shape index: {}]
  %s7 = inlined_call_operand.hbm [shape: f32[1,8], index: 7, kind: output, shape index: {}]
  %s8 = sld [smem:[#allocation0]]
  $region50: #{tpu_custom_call.1} parent=0
    _
  %s10 = ssub.s32 1, %s8
  %s11 = scalar_select 0, %s10, %s8
  %v12 = vstv %s6
  %13 = vst [vmem:[#allocation2] sm:$0x1] %v12
  $region1: #{tpu_custom_call.1} parent=0
    #allocation3 [shape = 'u8[2048]{0}', space=vmem, size = 0x800, scoped, tag = 'input window, operand 0, single buffered']
    #allocation4 [shape = 's32[1]{0}', space=sflag, size = 0x4, scoped, tag = 'scoped memory for tpu_custom_call.1']
    #allocation5 [shape = 's32[1]{0}', space=sflag, size = 0x4, scoped, tag = 'scoped memory for tpu_custom_call.1']
    #allocation6 [shape = 'u8[16384]{0}', space=vmem, size = 0x4000, scoped, tag = 'input window, operand 1, single buffered']
    #allocation7 [shape = 's32[1]{0}', space=sflag, size = 0x4, scoped, tag = 'scoped memory for tpu_custom_call.1']
    #allocation8 [shape = 'u8[65536]{0}', space=vmem, size = 0x10000, scoped, tag = 'input window, operand 3, single buffered']
    #allocation9 [shape = 'u8[512]{0}', space=vmem, size = 0x400, scoped, tag = 'output window, operand 0, single buffered']
    %14 = vsyncpa [#allocation4], 0
    %15 = vsyncpa [#allocation7], 0
    %16 = vsyncpa [#allocation5], 0
    // Predicated region
    $region2: #{tpu_custom_call.1} parent=1 // pred_check
      _
    $region3: #{tpu_custom_call.1} parent=1 // pred_check_branch
      %18 = sbr.rel (0) target = $region5
    $region4: #{tpu_custom_call.1} parent=1 // pred_region
      %s20 = ssub.s32 64, 64
      %21 = vsyncadd [#allocation4], %s20
      %s23 = sshll.u32 [#allocation3], 4
      %s24 = int_to_ptr.vmem [resolvable:$true] %s23
      %26 = dma.hbm_to_vmem [thread:$0]  %s0, 64, %s24, [#allocation4]
    $region5: #{tpu_custom_call.1} parent=1 // pred_fallthru
      _
    // Predicated region
    $region6: #{tpu_custom_call.1} parent=1 // pred_check
      _
    $region7: #{tpu_custom_call.1} parent=1 // pred_check_branch
      %28 = sbr.rel (0) target = $region9
    $region8: #{tpu_custom_call.1} parent=1 // pred_region
      %s30 = ssub.s32 512, 512
      %31 = vsyncadd [#allocation7], %s30
      %s32 = sshll.u32 [#allocation6], 4
      %s33 = int_to_ptr.vmem [resolvable:$true] %s32
      %38 = dma.hbm_to_vmem [thread:$0]  %s1, 512, %s33, [#allocation7], 128, 128, 8
    $region9: #{tpu_custom_call.1} parent=1 // pred_fallthru
      _
    // Predicated region
    $region10: #{tpu_custom_call.1} parent=1 // pred_check
      _
    $region11: #{tpu_custom_call.1} parent=1 // pred_check_branch
      %40 = sbr.rel (0) target = $region13
    $region12: #{tpu_custom_call.1} parent=1 // pred_region
      _
    $region13: #{tpu_custom_call.1} parent=1 // pred_fallthru
      _
    // Predicated region
    $region14: #{tpu_custom_call.1} parent=1 // pred_check
      _
    $region15: #{tpu_custom_call.1} parent=1 // pred_check_branch
      %42 = sbr.rel (0) target = $region17
    $region16: #{tpu_custom_call.1} parent=1 // pred_region
      %s44 = ssub.s32 2048, 2048
      %45 = vsyncadd [#allocation7], %s44
      %s46 = sshll.u32 [#allocation8], 4
      %s47 = int_to_ptr.vmem [resolvable:$true] %s46
      %52 = dma.hbm_to_vmem [thread:$0]  %s3, 2048, %s47, [#allocation7], 64, 64, 4
    $region17: #{tpu_custom_call.1} parent=1 // pred_fallthru
      _
    // Predicated region
    $region18: #{tpu_custom_call.1} parent=1 // pred_check
      _
    $region19: #{tpu_custom_call.1} parent=1 // pred_check_branch
      %54 = sbr.rel (0) target = $region21
    $region20: #{tpu_custom_call.1} parent=1 // pred_region
      _
    $region21: #{tpu_custom_call.1} parent=1 // pred_fallthru
      _
    // Predicated region
    $region22: #{tpu_custom_call.1} parent=1 // pred_check
      _
    $region23: #{tpu_custom_call.1} parent=1 // pred_check_branch
      %56 = sbr.rel (0) target = $region25
    $region24: #{tpu_custom_call.1} parent=1 // pred_region
      _
    $region25: #{tpu_custom_call.1} parent=1 // pred_fallthru
      _
    // Predicated region
    $region26: #{tpu_custom_call.1} parent=1 // pred_check
      _
    $region27: #{tpu_custom_call.1} parent=1 // pred_check_branch
      %58 = sbr.rel (0) target = $region29
    $region28: #{tpu_custom_call.1} parent=1 // pred_region
      _
    $region29: #{tpu_custom_call.1} parent=1 // pred_fallthru
      _
    // Predicated region
    $region30: #{tpu_custom_call.1} parent=1 // pred_check
      _
    $region31: #{tpu_custom_call.1} parent=1 // pred_check_branch
      %60 = sbr.rel (0) target = $region33
    $region32: #{tpu_custom_call.1} parent=1 // pred_region
      %61 = dma.done [#allocation4], 64
    $region33: #{tpu_custom_call.1} parent=1 // pred_fallthru
      _
    // Predicated region
    $region34: #{tpu_custom_call.1} parent=1 // pred_check
      _
    $region35: #{tpu_custom_call.1} parent=1 // pred_check_branch
      %63 = sbr.rel (0) target = $region37
    $region36: #{tpu_custom_call.1} parent=1 // pred_region
      %64 = dma.done [#allocation7], 512
    $region37: #{tpu_custom_call.1} parent=1 // pred_fallthru
      _
    // Predicated region
    $region38: #{tpu_custom_call.1} parent=1 // pred_check
      _
    $region39: #{tpu_custom_call.1} parent=1 // pred_check_branch
      %66 = sbr.rel (0) target = $region41
    $region40: #{tpu_custom_call.1} parent=1 // pred_region
      %67 = dma.done [#allocation7], 2048
    $region41: #{tpu_custom_call.1} parent=1 // pred_fallthru
      _
    %v69 = vld [vmem:[#allocation3] sm:$0xf]
    %v70 = vld [vmem:[#allocation6] sm:$0xff]
    %v71 = vld [vmem:[#allocation6 + $0x8] sm:$0xff]
    %v72 = vld [vmem:[#allocation6 + $0x10] sm:$0xff]
    %v73 = vld [vmem:[#allocation6 + $0x18] sm:$0xff]
    %v74 = vld [vmem:[%s2] sm:$0x3]
    %v76 = vlaneseq
    %v77 = vshrl.u32 %v76, 7
    %v78 = vsub.s32 0, %v77
    %v79 = vrot.slane %v74, %v78
    %v80 = vlaneseq
    %v81 = vshrl.u32 %v80, 7
    %v82 = vsub.s32 1, %v81
    %v83 = vrot.slane %v74, %v82
    %v90 = vunpack.c.l.b16 %v70
    %v91 = vunpack.c.h.b16 %v70
    %v92 = vunpack.c.l.b16 %v71
    %v93 = vunpack.c.h.b16 %v71
    %v94 = vunpack.c.l.b16 %v72
    %v95 = vunpack.c.h.b16 %v72
    %v96 = vunpack.c.l.b16 %v73
    %v97 = vunpack.c.h.b16 %v73
    %v98 = vpack.c.b16 %v92, %v90
    %v99 = vpack.c.b16 %v93, %v91
    %v100 = vpack.c.b16 %v96, %v94
    %v101 = vpack.c.b16 %v97, %v95
    %vm106 = vcmask 261120
    %v108 = vsel %vm106, %v69, 0
    %110 = vmatprep.subr.bf16.mxu0 %v99
    %111 = vmatpush1.bf16.msra.mxu0 %v98
    %112 = vmatprep.subr.bf16.mxu0 %v101
    %113 = vmatpush1.bf16.msra.mxu0 %v100
    %114 = vmatprep.subr.bf16.mxu0 0
    %115 = vmatpush1.bf16.msra.mxu0 0
    %116 = vmatprep.subr.bf16.mxu0 0
    %117 = vmatpush1.bf16.msra.mxu0 0
    %118 = vmatprep.subr.bf16.mxu0 0
    %119 = vmatpush1.bf16.msra.mxu0 0
    %120 = vmatprep.subr.bf16.mxu0 0
    %121 = vmatpush1.bf16.msra.mxu0 0
    %122 = vmatprep.subr.bf16.mxu0 0
    %123 = vmatpush1.bf16.msra.mxu0 0
    %124 = vmatprep.subr.bf16.mxu0 0
    %125 = vmatpush1.bf16.msra.mxu0 0
    %126 = vmatprep.subr.bf16.mxu0 0
    %127 = vmatpush1.bf16.msra.mxu0 0
    %128 = vmatprep.subr.bf16.mxu0 0
    %129 = vmatpush1.bf16.msra.mxu0 0
    %130 = vmatprep.subr.bf16.mxu0 0
    %131 = vmatpush1.bf16.msra.mxu0 0
    %132 = vmatprep.subr.bf16.mxu0 0
    %133 = vmatpush1.bf16.msra.mxu0 0
    %134 = vmatprep.subr.bf16.mxu0 0
    %135 = vmatpush1.bf16.msra.mxu0 0
    %136 = vmatprep.subr.bf16.mxu0 0
    %137 = vmatpush1.bf16.msra.mxu0 0
    %138 = vmatprep.subr.bf16.mxu0 0
    %139 = vmatpush1.bf16.msra.mxu0 0
    %140 = vmatprep.subr.bf16.mxu0 0
    %141 = vmatpush1.bf16.msra.mxu0 0
    %142 = vmatprep.mubr.bf16.mxu0 0
    %143 = vmatmul.mubr.bf16.gmra.mrb[0].mxu0 %v108
    %v144 = vpop.f32.mrb[0].mxu0
    %v145 = vadd.f32 %v79, %v144
    %v146 = vpop.f32.mrb[0].mxu0
    %v147 = vadd.f32 %v83, %v146
    %v148 = vpop.f32.mrb[0].mxu0
    %v149 = vpop.f32.mrb[0].mxu0
    %150 = vdwg.mxu0
    %v151 = vmax.f32 %v145, 0.0
    %v152 = vmax.f32 %v147, 0.0
    %v153 = vpack.c.bf16 %v151, %v151
    %v154 = vpack.c.bf16 %v152, %v152
    %v155 = vld [vmem:[#allocation8] sm:$0xf]
    %v156 = vld [vmem:[#allocation8 + $0x4] sm:$0xf]
    %v157 = vld [vmem:[#allocation8 + $0x8] sm:$0xf]
    %v158 = vld [vmem:[#allocation8 + $0xc] sm:$0xf]
    %v159 = vld [vmem:[#allocation8 + $0x10] sm:$0xf]
    %v160 = vld [vmem:[#allocation8 + $0x14] sm:$0xf]
    %v161 = vld [vmem:[#allocation8 + $0x18] sm:$0xf]
    %v162 = vld [vmem:[#allocation8 + $0x1c] sm:$0xf]
    %v163 = vld [vmem:[#allocation8 + $0x20] sm:$0xf]
    %v164 = vld [vmem:[#allocation8 + $0x24] sm:$0xf]
    %v165 = vld [vmem:[#allocation8 + $0x28] sm:$0xf]
    %v166 = vld [vmem:[#allocation8 + $0x2c] sm:$0xf]
    %v167 = vld [vmem:[#allocation8 + $0x30] sm:$0xf]
    %v168 = vld [vmem:[#allocation8 + $0x34] sm:$0xf]
    %v169 = vld [vmem:[#allocation8 + $0x38] sm:$0xf]
    %v170 = vld [vmem:[#allocation8 + $0x3c] sm:$0xf]
    %v171 = vld [vmem:[#allocation8 + $0x40] sm:$0xf]
    %v172 = vld [vmem:[#allocation8 + $0x44] sm:$0xf]
    %v173 = vld [vmem:[#allocation8 + $0x48] sm:$0xf]
    %v174 = vld [vmem:[#allocation8 + $0x4c] sm:$0xf]
    %v175 = vld [vmem:[#allocation8 + $0x50] sm:$0xf]
    %v176 = vld [vmem:[#allocation8 + $0x54] sm:$0xf]
    %v177 = vld [vmem:[#allocation8 + $0x58] sm:$0xf]
    %v178 = vld [vmem:[#allocation8 + $0x5c] sm:$0xf]
    %v179 = vld [vmem:[#allocation8 + $0x60] sm:$0xf]
    %v180 = vld [vmem:[#allocation8 + $0x64] sm:$0xf]
    %v181 = vld [vmem:[#allocation8 + $0x68] sm:$0xf]
    %v182 = vld [vmem:[#allocation8 + $0x6c] sm:$0xf]
    %v183 = vld [vmem:[#allocation8 + $0x70] sm:$0xf]
    %v184 = vld [vmem:[#allocation8 + $0x74] sm:$0xf]
    %v185 = vld [vmem:[#allocation8 + $0x78] sm:$0xf]
    %v186 = vld [vmem:[#allocation8 + $0x7c] sm:$0xf]
    %v187 = vld [vmem:[%s4] sm:$0x1]
    %v189 = vlaneseq
    %v190 = vshrl.u32 %v189, 7
    %v191 = vsub.s32 0, %v190
    %v192 = vrot.slane %v187, %v191
    %v226 = vunpack.c.l.b16 %v155
    %v227 = vunpack.c.l.b16 %v156
    %v228 = vunpack.c.l.b16 %v157
    %v229 = vunpack.c.l.b16 %v158
    %v230 = vunpack.c.l.b16 %v159
    %v231 = vunpack.c.l.b16 %v160
    %v232 = vunpack.c.l.b16 %v161
    %v233 = vunpack.c.l.b16 %v162
    %v234 = vunpack.c.l.b16 %v163
    %v235 = vunpack.c.l.b16 %v164
    %v236 = vunpack.c.l.b16 %v165
    %v237 = vunpack.c.l.b16 %v166
    %v238 = vunpack.c.l.b16 %v167
    %v239 = vunpack.c.l.b16 %v168
    %v240 = vunpack.c.l.b16 %v169
    %v241 = vunpack.c.l.b16 %v170
    %v242 = vunpack.c.l.b16 %v171
    %v243 = vunpack.c.l.b16 %v172
    %v244 = vunpack.c.l.b16 %v173
    %v245 = vunpack.c.l.b16 %v174
    %v246 = vunpack.c.l.b16 %v175
    %v247 = vunpack.c.l.b16 %v176
    %v248 = vunpack.c.l.b16 %v177
    %v249 = vunpack.c.l.b16 %v178
    %v250 = vunpack.c.l.b16 %v179
    %v251 = vunpack.c.l.b16 %v180
    %v252 = vunpack.c.l.b16 %v181
    %v253 = vunpack.c.l.b16 %v182
    %v254 = vunpack.c.l.b16 %v183
    %v255 = vunpack.c.l.b16 %v184
    %v256 = vunpack.c.l.b16 %v185
    %v257 = vunpack.c.l.b16 %v186
    %v258 = vpack.c.b16 %v227, %v226
    %v259 = vpack.c.b16 %v229, %v228
    %v260 = vpack.c.b16 %v231, %v230
    %v261 = vpack.c.b16 %v233, %v232
    %v262 = vpack.c.b16 %v235, %v234
    %v263 = vpack.c.b16 %v237, %v236
    %v264 = vpack.c.b16 %v239, %v238
    %v265 = vpack.c.b16 %v241, %v240
    %v266 = vpack.c.b16 %v243, %v242
    %v267 = vpack.c.b16 %v245, %v244
    %v268 = vpack.c.b16 %v247, %v246
    %v269 = vpack.c.b16 %v249, %v248
    %v270 = vpack.c.b16 %v251, %v250
    %v271 = vpack.c.b16 %v253, %v252
    %v272 = vpack.c.b16 %v255, %v254
    %v273 = vpack.c.b16 %v257, %v256
    %290 = vmatprep.subr.bf16.mxu0 0
    %291 = vmatpush1.bf16.msra.mxu0 %v258
    %292 = vmatprep.subr.bf16.mxu0 0
    %293 = vmatpush1.bf16.msra.mxu0 %v259
    %294 = vmatprep.subr.bf16.mxu0 0
    %295 = vmatpush1.bf16.msra.mxu0 %v260
    %296 = vmatprep.subr.bf16.mxu0 0
    %297 = vmatpush1.bf16.msra.mxu0 %v261
    %298 = vmatprep.subr.bf16.mxu0 0
    %299 = vmatpush1.bf16.msra.mxu0 %v262
    %300 = vmatprep.subr.bf16.mxu0 0
    %301 = vmatpush1.bf16.msra.mxu0 %v263
    %302 = vmatprep.subr.bf16.mxu0 0
    %303 = vmatpush1.bf16.msra.mxu0 %v264
    %304 = vmatprep.subr.bf16.mxu0 0
    %305 = vmatpush1.bf16.msra.mxu0 %v265
    %306 = vmatprep.subr.bf16.mxu0 0
    %307 = vmatpush1.bf16.msra.mxu0 %v266
    %308 = vmatprep.subr.bf16.mxu0 0
    %309 = vmatpush1.bf16.msra.mxu0 %v267
    %310 = vmatprep.subr.bf16.mxu0 0
    %311 = vmatpush1.bf16.msra.mxu0 %v268
    %312 = vmatprep.subr.bf16.mxu0 0
    %313 = vmatpush1.bf16.msra.mxu0 %v269
    %314 = vmatprep.subr.bf16.mxu0 0
    %315 = vmatpush1.bf16.msra.mxu0 %v270
    %316 = vmatprep.subr.bf16.mxu0 0
    %317 = vmatpush1.bf16.msra.mxu0 %v271
    %318 = vmatprep.subr.bf16.mxu0 0
    %319 = vmatpush1.bf16.msra.mxu0 %v272
    %320 = vmatprep.subr.bf16.mxu0 0
    %321 = vmatpush1.bf16.msra.mxu0 %v273
    %322 = vmatprep.mubr.bf16.mxu0 %v154
    %323 = vmatmul.mubr.bf16.gmra.mrb[0].mxu0 %v153
    %v324 = vpop.f32.mrb[0].mxu0
    %v325 = vadd.f32 %v192, %v324
    %v326 = vpop.f32.mrb[0].mxu0
    %v327 = vpop.f32.mrb[0].mxu0
    %v328 = vpop.f32.mrb[0].mxu0
    %329 = vdwg.mxu0
    %v330 = vmax.f32 %v325, 0.0
    %v331 = vpack.c.bf16 %v330, %v330
    %v332 = vld [vmem:[%s5] sm:$0xf]
    %333 = vmatprep.subr.bf16.mxu0 0
    %334 = vmatpush1.bf16.xpose.msra.mxu0 %v331
    %335 = vmatprep.subr.bf16.mxu0 0
    %336 = vmatpush1.bf16.xpose.msra.mxu0 0
    %337 = vmatprep.subr.bf16.mxu0 0
    %338 = vmatpush1.bf16.xpose.msra.mxu0 0
    %339 = vmatprep.subr.bf16.mxu0 0
    %340 = vmatpush1.bf16.xpose.msra.mxu0 0
    %341 = vmatprep.subr.bf16.mxu0 0
    %342 = vmatpush1.bf16.xpose.msra.mxu0 0
    %343 = vmatprep.subr.bf16.mxu0 0
    %344 = vmatpush1.bf16.xpose.msra.mxu0 0
    %345 = vmatprep.subr.bf16.mxu0 0
    %346 = vmatpush1.bf16.xpose.msra.mxu0 0
    %347 = vmatprep.subr.bf16.mxu0 0
    %348 = vmatpush1.bf16.xpose.msra.mxu0 0
    %349 = vmatprep.subr.bf16.mxu0 0
    %350 = vmatpush1.bf16.xpose.msra.mxu0 0
    %351 = vmatprep.subr.bf16.mxu0 0
    %352 = vmatpush1.bf16.xpose.msra.mxu0 0
    %353 = vmatprep.subr.bf16.mxu0 0
    %354 = vmatpush1.bf16.xpose.msra.mxu0 0
    %355 = vmatprep.subr.bf16.mxu0 0
    %356 = vmatpush1.bf16.xpose.msra.mxu0 0
    %357 = vmatprep.subr.bf16.mxu0 0
    %358 = vmatpush1.bf16.xpose.msra.mxu0 0
    %359 = vmatprep.subr.bf16.mxu0 0
    %360 = vmatpush1.bf16.xpose.msra.mxu0 0
    %361 = vmatprep.subr.bf16.mxu0 0
    %362 = vmatpush1.bf16.xpose.msra.mxu0 0
    %363 = vmatprep.subr.bf16.mxu0 0
    %364 = vmatpush1.bf16.xpose.msra.mxu0 0
    %365 = vmatprep.mubr.bf16.mxu0 0
    %366 = vmatmul.mubr.bf16.gmra.mrb[0].mxu0 %v332
    %v367 = vpop.f32.mrb[0].mxu0
    %v368 = vadd.f32 0.0, %v367
    %v369 = vpop.f32.mrb[0].mxu0
    %v370 = vpop.f32.mrb[0].mxu0
    %v371 = vpop.f32.mrb[0].mxu0
    %372 = vdwg.mxu0
    %v373 = vld [vmem:[#allocation2] sm:$0x1]
    %375 = vset.pattern.permute.xlu0 0
    %376 = vperm.xlu0 %375, %v373
    %v377 = vpop.permute.xlu0 %376
    %v379 = vlaneseq
    %v380 = vshrl.u32 %v379, 7
    %v381 = vsub.s32 0, %v380
    %v382 = vrot.slane %v377, %v381
    %v383 = vadd.f32 %v368, %v382
    %vm384 = vcmask 57344
    %385 = vst.msk [vmem:[#allocation9] sm:$0x1] %vm384, %v383
    // Predicated region
    $region42: #{tpu_custom_call.1} parent=1 // pred_check
      _
    $region43: #{tpu_custom_call.1} parent=1 // pred_check_branch
      %387 = sbr.rel (0) target = $region45
    $region44: #{tpu_custom_call.1} parent=1 // pred_region
      %s389 = ssub.s32 16, 16
      %390 = vsyncadd [#allocation5], %s389
      %s392 = sshll.u32 [#allocation9], 4
      %s393 = int_to_ptr.vmem [resolvable:$true] %s392
      %395 = dma.vmem_to_hbm [thread:$0]  %s393, 16, %s7, [#allocation5]
    $region45: #{tpu_custom_call.1} parent=1 // pred_fallthru
      _
    // Predicated region
    $region46: #{tpu_custom_call.1} parent=1 // pred_check
      _
    $region47: #{tpu_custom_call.1} parent=1 // pred_check_branch
      %397 = sbr.rel (0) target = $region49
    $region48: #{tpu_custom_call.1} parent=1 // pred_region
      %398 = dma.done [#allocation5], 16
    $region49: #{tpu_custom_call.1} parent=1 // pred_fallthru
      _
    %399 = vsyncpa [#allocation4], 1
    %400 = vsyncpa [#allocation7], 1
    %401 = vsyncpa [#allocation5], 1

</llo_original>
